<compile_context>
chip_gen: v7x
topology: tpu7x:2x2x1
jax: 0.10.0
libtpu: 0.0.40
codegen_flags: <defaults>
</compile_context>

<pallas_src>
import functools

import jax
import jax.numpy as jnp
from jax.experimental import pallas as pl
from jax.experimental.pallas import tpu as pltpu


def _round_up(a, b):
    return -(-a // b) * b


def _policynet_kernel(head_ref, scales_ref,                 # SMEM scalar prefetch
                      x_ref, w1_ref, b1_ref, w2_ref, b2_ref, w3_ref, b3_ref,
                      o_ref):
    x = x_ref[...]
    # fc1 + relu (f32 accumulation regardless of input dtype)
    h1 = jnp.dot(x, w1_ref[...], preferred_element_type=jnp.float32) + b1_ref[...]
    h1 = jnp.maximum(h1, 0.0)
    # fc2 + relu
    h2 = jnp.dot(h1.astype(w2_ref.dtype), w2_ref[...],
                 preferred_element_type=jnp.float32) + b2_ref[...]
    h2 = jnp.maximum(h2, 0.0)
    # selected fc3 head (block already points at head `head_ref[0]`)
    logits = jnp.dot(h2.astype(w3_ref.dtype), w3_ref[0],
                     preferred_element_type=jnp.float32) + b3_ref[0]

    # mask the zero-padded action columns with a dtype-safe value, then a
    # numerically stable softmax.  (1, pad_n) iota -> broadcast compare.
    n_valid = scales_ref[head_ref[0]]
    col = jax.lax.broadcasted_iota(jnp.int32, (1, logits.shape[-1]), 1)
    neg_big = jnp.asarray(jnp.finfo(logits.dtype).min, logits.dtype)
    logits = jnp.where(col < n_valid, logits, neg_big)

    m = jnp.max(logits, axis=-1, keepdims=True)
    e = jnp.exp(logits - m)                      # padded cols underflow to 0.0
    s = jnp.sum(e, axis=-1, keepdims=True)
    o_ref[...] = (e * pl.reciprocal(s, approx=True)).astype(o_ref.dtype)


def policy_net_forward(x, params, *, tile_m_max=1024, out_dtype=None):
    """x: (batch, space_length+1).  params: output of prepare_params().

    Returns (batch, PAD_N) softmax of the head selected by round(x[0, -1]);
    columns >= action_scale_list[idx] are exactly 0.  Output dtype defaults to
    the weight compute dtype.  Call under jax.jit for single-dispatch forward.
    """
    w1, b1 = params["w1"], params["b1"]
    w2, b2 = params["w2"], params["b2"]
    w3, b3 = params["w3"], params["b3"]          # stacked & padded heads
    scales = params["scales"]                    # (num_heads,) int32
    _, _, pad_n = w3.shape
    batch, in_dim = x.shape

    compute_dtype = w1.dtype
    if out_dtype is None:
        out_dtype = compute_dtype

    # head index = last feature of the first row (== int(input[0][-1].item()));
    # round for robustness against lossy upstream casts of exact integers.
    head_arr = jnp.reshape(jnp.round(x[0, -1]).astype(jnp.int32), (1,))

    # batch tiling: 16-row alignment for bf16 packing, 8 for f32.  Large
    # batches get >=2 grid steps so v7x's two TensorCores both work.
    row_align = 16 if compute_dtype == jnp.bfloat16 else 8
    batch_r = _round_up(max(batch, 1), row_align)
    if batch_r >= 256:
        tile_m = min(tile_m_max, _round_up(-(-batch_r // 2), row_align))
    else:
        tile_m = min(tile_m_max, batch_r)
    batch_p = _round_up(batch_r, tile_m)
    if batch_p != batch:
        x = jnp.pad(x, ((0, batch_p - batch), (0, 0)))
    grid = (batch_p // tile_m,)

    xc = x.astype(compute_dtype)                 # activations only; weights pre-cast

    out = pl.pallas_call(
        _policynet_kernel,
        out_shape=jax.ShapeDtypeStruct((batch_p, pad_n), out_dtype),
        grid_spec=pltpu.PrefetchScalarGridSpec(
            num_scalar_prefetch=2,
            grid=grid,
            in_specs=[
                # x: tiled over batch
                pl.BlockSpec((tile_m, in_dim), lambda i, h, s: (i, 0)),
                # weights / biases: constant index_map -> VMEM-resident
                pl.BlockSpec(w1.shape, lambda i, h, s: (0, 0)),
                pl.BlockSpec(b1.shape, lambda i, h, s: (0, 0)),
                pl.BlockSpec(w2.shape, lambda i, h, s: (0, 0)),
                pl.BlockSpec(b2.shape, lambda i, h, s: (0, 0)),
                # fc3 head selected via scalar prefetch (only that head is DMA'd)
                pl.BlockSpec((1,) + w3.shape[1:], lambda i, h, s: (h[0], 0, 0)),
                pl.BlockSpec((1,) + b3.shape[1:], lambda i, h, s: (h[0], 0, 0)),
            ],
            out_specs=pl.BlockSpec((tile_m, pad_n), lambda i, h, s: (i, 0)),
        ),
        compiler_params=pltpu.CompilerParams(
            dimension_semantics=("parallel",)),
    )(head_arr, scales, xc, w1, b1, w2, b2, w3, b3)
    return out[:batch]


def init_params(key, space_length, action_scale_list):
    """f32 master params, torch.nn.Linear-style init U(-1/sqrt(fan_in), ...).
    Heads are zero-padded to a lane-dense width and stacked."""
    in1 = space_length + 1
    num_heads = len(action_scale_list)
    max_scale = max(action_scale_list)
    pad_n = max(128, _round_up(max_scale, 128))

    keys = jax.random.split(key, 2 * (2 + num_heads))

    def linear(kw, kb, fan_in, fan_out):
        bound = 1.0 / (fan_in ** 0.5)
        w = jax.random.uniform(kw, (fan_in, fan_out),
                               minval=-bound, maxval=bound, dtype=jnp.float32)
        b = jax.random.uniform(kb, (1, fan_out),
                               minval=-bound, maxval=bound, dtype=jnp.float32)
        return w, b

    w1, b1 = linear(keys[0], keys[1], in1, 128)
    w2, b2 = linear(keys[2], keys[3], 128, 128)

    w3_list, b3_list = [], []
    for h, scale in enumerate(action_scale_list):
        w, b = linear(keys[4 + 2 * h], keys[5 + 2 * h], 128, scale)
        w3_list.append(jnp.pad(w, ((0, 0), (0, pad_n - scale))))
        b3_list.append(jnp.pad(b, ((0, 0), (0, pad_n - scale))))
    w3 = jnp.stack(w3_list)   # (num_heads, 128, pad_n)
    b3 = jnp.stack(b3_list)   # (num_heads, 1, pad_n)

    return {"w1": w1, "b1": b1, "w2": w2, "b2": b2,
            "w3": w3, "b3": b3,
            "scales": jnp.array(action_scale_list, dtype=jnp.int32)}


def prepare_params(params, compute_dtype=jnp.bfloat16):
    """Pre-cast matmul weights ONCE (biases stay f32; they add onto f32 acc)."""
    p = dict(params)
    for k in ("w1", "w2", "w3"):
        p[k] = params[k].astype(compute_dtype)
    return p


def _reference_forward(x, params, head_idx):
    scale = int(params["scales"][head_idx])
    h1 = jnp.maximum(x @ params["w1"] + params["b1"], 0.0)
    h2 = jnp.maximum(h1 @ params["w2"] + params["b2"], 0.0)
    logits = h2 @ params["w3"][head_idx, :, :scale] + params["b3"][head_idx, :, :scale]
    return jax.nn.softmax(logits, axis=-1)


if __name__ == "__main__":
    key = jax.random.PRNGKey(0)
    k_param, k_x = jax.random.split(key)

    space_length = 4
    action_scale_list = [10, 6]
    batch = 8
    head_idx = 1   # encoded in the last feature of every input row

    master = init_params(k_param, space_length, action_scale_list)   # f32 master

    state = jax.random.normal(k_x, (batch, space_length), dtype=jnp.float32)
    idx_col = jnp.full((batch, 1), float(head_idx), dtype=jnp.float32)
    x = jnp.concatenate([state, idx_col], axis=-1)        # (batch, space_length+1)

    scale = action_scale_list[head_idx]
    pad_n = master["w3"].shape[-1]
    ref = _reference_forward(x, master, head_idx)

    fwd = jax.jit(policy_net_forward, static_argnames=("tile_m_max", "out_dtype"))

    # --- default (bf16 weights, bf16 output) production path ---------------
    params_bf16 = prepare_params(master, jnp.bfloat16)
    out_bf16 = jax.block_until_ready(fwd(x, params_bf16))
    assert out_bf16.shape == (batch, pad_n), out_bf16.shape
    assert out_bf16.dtype == jnp.bfloat16, out_bf16.dtype
    ob = out_bf16.astype(jnp.float32)
    assert jnp.allclose(ob[:, :scale], ref, atol=5e-2), "bf16 path mismatch vs reference"
    assert jnp.allclose(ob[:, scale:], 0.0, atol=1e-6), "padded columns must be zero"
    assert jnp.allclose(ob[:, :scale].sum(-1), 1.0, atol=3e-2), "softmax must sum to ~1"

    # --- f32 path for a tighter numerical check -----------------------------
    params_f32 = prepare_params(master, jnp.float32)
    out_f32 = jax.block_until_ready(fwd(x, params_f32))
    assert out_f32.shape == (batch, pad_n), out_f32.shape
    assert out_f32.dtype == jnp.float32, out_f32.dtype
    # tolerance accounts for the approx EUP reciprocal in the softmax tail
    assert jnp.allclose(out_f32[:, :scale], ref, atol=5e-3, rtol=5e-3), "f32 path mismatch"
    assert jnp.allclose(out_f32[:, scale:], 0.0, atol=1e-6), "padded columns must be zero"
    assert jnp.allclose(out_f32[:, :scale].sum(-1), 1.0, atol=5e-3), "softmax must sum to ~1"

    print("KERNEL_OK")
</pallas_src>

<mosaic_0001>
module attributes {stable_mosaic.version = 11 : i64} {
  func.func @_policynet_kernel(%arg0: i32, %arg1: memref<1xi32, #tpu.memory_space<smem>>, %arg2: memref<2xi32, #tpu.memory_space<smem>>, %arg3: memref<16x5xbf16, #tpu.memory_space<vmem>>, %arg4: memref<5x128xbf16, #tpu.memory_space<vmem>>, %arg5: memref<1x128xf32, #tpu.memory_space<vmem>>, %arg6: memref<128x128xbf16, #tpu.memory_space<vmem>>, %arg7: memref<1x128xf32, #tpu.memory_space<vmem>>, %arg8: memref<1x128x128xbf16, #tpu.memory_space<vmem>>, %arg9: memref<1x1x128xf32, #tpu.memory_space<vmem>>, %arg10: memref<16x128xbf16, #tpu.memory_space<vmem>>) attributes {dimension_semantics = [#tpu.dimension_semantics<parallel>], iteration_bounds = array<i64: 1>, scalar_prefetch = 2 : i64, scratch_operands = 0 : i64, tpu.core_type = #tpu.core_type<tc>, window_params = [{transform_indices = @transform_0, window_bounds = array<i64: 16, 5>}, {pipeline_mode = #tpu.pipeline_mode<synchronous>, transform_indices = @transform_1, window_bounds = array<i64: 5, 128>}, {pipeline_mode = #tpu.pipeline_mode<synchronous>, transform_indices = @transform_2, window_bounds = array<i64: 1, 128>}, {pipeline_mode = #tpu.pipeline_mode<synchronous>, transform_indices = @transform_3, window_bounds = array<i64: 128, 128>}, {pipeline_mode = #tpu.pipeline_mode<synchronous>, transform_indices = @transform_4, window_bounds = array<i64: 1, 128>}, {transform_indices = @transform_5, window_bounds = array<i64: 1, 128, 128>}, {transform_indices = @transform_6, window_bounds = array<i64: 1, 1, 128>}, {transform_indices = @transform_7, window_bounds = array<i64: 16, 128>}]} {
    %c0 = arith.constant 0 : index
    %c0_0 = arith.constant 0 : index
    %0 = vector.load %arg3[%c0, %c0_0] : memref<16x5xbf16, #tpu.memory_space<vmem>>, vector<16x5xbf16>
    %c0_1 = arith.constant 0 : index
    %c0_2 = arith.constant 0 : index
    %1 = vector.load %arg4[%c0_1, %c0_2] : memref<5x128xbf16, #tpu.memory_space<vmem>>, vector<5x128xbf16>
    %cst = arith.constant dense<0.000000e+00> : vector<16x128xf32>
    %2 = tpu.matmul %0, %1, %cst {dimension_numbers = #tpu.dot_dimension_numbers<[1], [0], [0], [1], [0, 0, 1, 1], [], []>} : vector<16x5xbf16>, vector<5x128xbf16>, vector<16x128xf32> -> vector<16x128xf32>
    %c0_3 = arith.constant 0 : index
    %c0_4 = arith.constant 0 : index
    %3 = vector.load %arg5[%c0_3, %c0_4] : memref<1x128xf32, #tpu.memory_space<vmem>>, vector<1x128xf32>
    %4 = vector.broadcast %3 : vector<1x128xf32> to vector<16x128xf32>
    %5 = arith.addf %2, %4 : vector<16x128xf32>
    %cst_5 = arith.constant 0.000000e+00 : f32
    %6 = vector.broadcast %cst_5 : f32 to vector<16x128xf32>
    %7 = arith.maximumf %5, %6 : vector<16x128xf32>
    %8 = arith.truncf %7 : vector<16x128xf32> to vector<16x128xbf16>
    %c0_6 = arith.constant 0 : index
    %c0_7 = arith.constant 0 : index
    %9 = vector.load %arg6[%c0_6, %c0_7] : memref<128x128xbf16, #tpu.memory_space<vmem>>, vector<128x128xbf16>
    %cst_8 = arith.constant dense<0.000000e+00> : vector<16x128xf32>
    %10 = tpu.matmul %8, %9, %cst_8 {dimension_numbers = #tpu.dot_dimension_numbers<[1], [0], [0], [1], [0, 0, 1, 1], [], []>} : vector<16x128xbf16>, vector<128x128xbf16>, vector<16x128xf32> -> vector<16x128xf32>
    %c0_9 = arith.constant 0 : index
    %c0_10 = arith.constant 0 : index
    %11 = vector.load %arg7[%c0_9, %c0_10] : memref<1x128xf32, #tpu.memory_space<vmem>>, vector<1x128xf32>
    %12 = vector.broadcast %11 : vector<1x128xf32> to vector<16x128xf32>
    %13 = arith.addf %10, %12 : vector<16x128xf32>
    %cst_11 = arith.constant 0.000000e+00 : f32
    %14 = vector.broadcast %cst_11 : f32 to vector<16x128xf32>
    %15 = arith.maximumf %13, %14 : vector<16x128xf32>
    %16 = arith.truncf %15 : vector<16x128xf32> to vector<16x128xbf16>
    %c0_12 = arith.constant 0 : index
    %c0_13 = arith.constant 0 : index
    %c0_14 = arith.constant 0 : index
    %17 = vector.load %arg8[%c0_12, %c0_13, %c0_14] : memref<1x128x128xbf16, #tpu.memory_space<vmem>>, vector<1x128x128xbf16>
    %18 = vector.shape_cast %17 : vector<1x128x128xbf16> to vector<128x128xbf16>
    %cst_15 = arith.constant dense<0.000000e+00> : vector<16x128xf32>
    %19 = tpu.matmul %16, %18, %cst_15 {dimension_numbers = #tpu.dot_dimension_numbers<[1], [0], [0], [1], [0, 0, 1, 1], [], []>} : vector<16x128xbf16>, vector<128x128xbf16>, vector<16x128xf32> -> vector<16x128xf32>
    %c0_16 = arith.constant 0 : index
    %c0_17 = arith.constant 0 : index
    %c0_18 = arith.constant 0 : index
    %20 = vector.load %arg9[%c0_16, %c0_17, %c0_18] : memref<1x1x128xf32, #tpu.memory_space<vmem>>, vector<1x1x128xf32>
    %21 = vector.shape_cast %20 : vector<1x1x128xf32> to vector<1x128xf32>
    %22 = vector.broadcast %21 : vector<1x128xf32> to vector<16x128xf32>
    %23 = arith.addf %19, %22 : vector<16x128xf32>
    %c0_19 = arith.constant 0 : index
    %24 = memref.load %arg1[%c0_19] : memref<1xi32, #tpu.memory_space<smem>>
    %25 = arith.index_cast %24 : i32 to index
    %26 = memref.load %arg2[%25] : memref<2xi32, #tpu.memory_space<smem>>
    %27 = tpu.iota {dimensions = array<i32: 1>} : vector<1x128xi32>
    %28 = vector.broadcast %26 : i32 to vector<1x128xi32>
    %29 = arith.cmpi slt, %27, %28 : vector<1x128xi32>
    %cst_20 = arith.constant -3.40282347E+38 : f32
    %30 = vector.shape_cast %29 : vector<1x128xi1> to vector<1x128xi1>
    %31 = vector.broadcast %30 : vector<1x128xi1> to vector<16x128xi1>
    %32 = vector.broadcast %cst_20 : f32 to vector<16x128xf32>
    %33 = arith.select %31, %23, %32 : vector<16x128xi1>, vector<16x128xf32>
    %cst_21 = arith.constant dense<0xFF800000> : vector<16xf32>
    %34 = vector.multi_reduction <maximumf>, %33, %cst_21 [1] : vector<16x128xf32> to vector<16xf32>
    %35 = vector.shape_cast %34 : vector<16xf32> to vector<16x1xf32>
    %36 = vector.broadcast %35 : vector<16x1xf32> to vector<16x128xf32>
    %37 = arith.subf %33, %36 : vector<16x128xf32>
    %38 = math.exp %37 : vector<16x128xf32>
    %cst_22 = arith.constant dense<0.000000e+00> : vector<16xf32>
    %39 = vector.multi_reduction <add>, %38, %cst_22 [1] : vector<16x128xf32> to vector<16xf32>
    %40 = vector.shape_cast %39 : vector<16xf32> to vector<16x1xf32>
    %41 = tpu.reciprocal %40 {approx = true} : vector<16x1xf32> -> vector<16x1xf32>
    %42 = vector.broadcast %41 : vector<16x1xf32> to vector<16x128xf32>
    %43 = arith.mulf %38, %42 : vector<16x128xf32>
    %44 = arith.truncf %43 : vector<16x128xf32> to vector<16x128xbf16>
    %c0_23 = arith.constant 0 : index
    %c0_24 = arith.constant 0 : index
    %45 = vector.load %arg10[%c0_23, %c0_24] : memref<16x128xbf16, #tpu.memory_space<vmem>>, vector<16x128xbf16>
    tpu.vector_store %arg10[%c0_23, %c0_24], %44 {strides = array<i32>} : memref<16x128xbf16, #tpu.memory_space<vmem>>, vector<16x128xbf16>,
    return
  }
  func.func @transform_0(%arg0: i32, %arg1: memref<1xi32, #tpu.memory_space<smem>>, %arg2: memref<2xi32, #tpu.memory_space<smem>>) -> (i32, i32) {
    %c0_i32 = arith.constant 0 : i32
    %c0_i32_0 = arith.constant 0 : i32
    return %arg0, %c0_i32 : i32, i32
  }
  func.func @transform_1(%arg0: i32, %arg1: memref<1xi32, #tpu.memory_space<smem>>, %arg2: memref<2xi32, #tpu.memory_space<smem>>) -> (i32, i32) {
    %c0_i32 = arith.constant 0 : i32
    %c0_i32_0 = arith.constant 0 : i32
    %c0_i32_1 = arith.constant 0 : i32
    return %c0_i32, %c0_i32_0 : i32, i32
  }
  func.func @transform_2(%arg0: i32, %arg1: memref<1xi32, #tpu.memory_space<smem>>, %arg2: memref<2xi32, #tpu.memory_space<smem>>) -> (i32, i32) {
    %c0_i32 = arith.constant 0 : i32
    %c0_i32_0 = arith.constant 0 : i32
    %c0_i32_1 = arith.constant 0 : i32
    return %c0_i32, %c0_i32_0 : i32, i32
  }
  func.func @transform_3(%arg0: i32, %arg1: memref<1xi32, #tpu.memory_space<smem>>, %arg2: memref<2xi32, #tpu.memory_space<smem>>) -> (i32, i32) {
    %c0_i32 = arith.constant 0 : i32
    %c0_i32_0 = arith.constant 0 : i32
    %c0_i32_1 = arith.constant 0 : i32
    return %c0_i32, %c0_i32_0 : i32, i32
  }
  func.func @transform_4(%arg0: i32, %arg1: memref<1xi32, #tpu.memory_space<smem>>, %arg2: memref<2xi32, #tpu.memory_space<smem>>) -> (i32, i32) {
    %c0_i32 = arith.constant 0 : i32
    %c0_i32_0 = arith.constant 0 : i32
    %c0_i32_1 = arith.constant 0 : i32
    return %c0_i32, %c0_i32_0 : i32, i32
  }
  func.func @transform_5(%arg0: i32, %arg1: memref<1xi32, #tpu.memory_space<smem>>, %arg2: memref<2xi32, #tpu.memory_space<smem>>) -> (i32, i32, i32) {
    %c0 = arith.constant 0 : index
    %0 = memref.load %arg1[%c0] : memref<1xi32, #tpu.memory_space<smem>>
    %c0_i32 = arith.constant 0 : i32
    %c0_i32_0 = arith.constant 0 : i32
    %c0_i32_1 = arith.constant 0 : i32
    return %0, %c0_i32, %c0_i32_0 : i32, i32, i32
  }
  func.func @transform_6(%arg0: i32, %arg1: memref<1xi32, #tpu.memory_space<smem>>, %arg2: memref<2xi32, #tpu.memory_space<smem>>) -> (i32, i32, i32) {
    %c0 = arith.constant 0 : index
    %0 = memref.load %arg1[%c0] : memref<1xi32, #tpu.memory_space<smem>>
    %c0_i32 = arith.constant 0 : i32
    %c0_i32_0 = arith.constant 0 : i32
    %c0_i32_1 = arith.constant 0 : i32
    return %0, %c0_i32, %c0_i32_0 : i32, i32, i32
  }
  func.func @transform_7(%arg0: i32, %arg1: memref<1xi32, #tpu.memory_space<smem>>, %arg2: memref<2xi32, #tpu.memory_space<smem>>) -> (i32, i32) {
    %c0_i32 = arith.constant 0 : i32
    %c0_i32_0 = arith.constant 0 : i32
    return %arg0, %c0_i32 : i32, i32
  }
}

</mosaic_0001>

<llo_original>
// kernel: policy_net_forward.1
$region0: #{policy_net_forward.1}
  #allocation0 [shape = 'u32[]', space=smem, size = 0x4, offset = 0x4, fixed_abs, tag = 'smem constant byte address 0x4 - core index']
  #allocation1 [shape = 'u32[144,128]{1,0:T(1,128)}', space=vmem, size = 0x12000, scoped, tag = 'internal scratch']
  #allocation2 [shape = 's32[1]{0}', space=sflag, size = 0x4, scoped, tag = 'scoped memory for policy_net_forward.1']
  #allocation3 [shape = 's32[1]{0:T(128)S(6)}', space=smem, size = 0x200, scoped, tag = 'prefetched SMEM operand 0']
  #allocation4 [shape = 'u8[512]{0}', space=smem, size = 0x200, scoped, tag = 'prefetched SMEM operand 1']
  %s0 = inlined_call_operand.<no memory space> [shape: s32[1], index: 0, kind: input, shape index: {}]
  %s1 = inlined_call_operand.vmem [shape: s32[2], index: 1, kind: input, shape index: {}]
  %s2 = inlined_call_operand.vmem [shape: bf16[16,5], index: 2, kind: input, shape index: {}]
  %s3 = inlined_call_operand.vmem [shape: bf16[5,128], index: 3, kind: input, shape index: {}]
  %s4 = inlined_call_operand.vmem [shape: f32[1,128], index: 4, kind: input, shape index: {}]
  %s5 = inlined_call_operand.hbm [shape: bf16[128,128], index: 5, kind: input, shape index: {}]
  %s6 = inlined_call_operand.vmem [shape: f32[1,128], index: 6, kind: input, shape index: {}]
  %s7 = inlined_call_operand.hbm [shape: bf16[2,128,128], index: 7, kind: input, shape index: {}]
  %s8 = inlined_call_operand.vmem [shape: f32[2,1,128], index: 8, kind: input, shape index: {}]
  %s9 = inlined_call_operand.vmem [shape: bf16[16,128], index: 9, kind: output, shape index: {}]
  %s10 = sld [smem:[#allocation0]]
  $region46: #{policy_net_forward.1} parent=0
    _
  %s12 = ssub.s32 1, %s10
  %s13 = scalar_select 0, %s12, %s10
  %14 = sst [smem:[#allocation3]] %s0
  %s15 = sshll.u32 %s1, 4
  %s16 = int_to_ptr.vmem [resolvable:$true] %s15
  %18 = dma.vmem_to_smem %s16, 16, [#allocation4], [#allocation2]
  %19 = dma.done [#allocation2], 16
  %20 = sfence
  $region1: #{policy_net_forward.1} parent=0
    #allocation5 [shape = 'u8[32768]{0}', space=vmem, size = 0x8000, scoped, tag = 'input window, operand 5, single buffered']
    #allocation6 [shape = 's32[1]{0}', space=sflag, size = 0x4, scoped, tag = 'scoped memory for policy_net_forward.1']
    #allocation7 [shape = 'u8[32768]{0}', space=vmem, size = 0x8000, scoped, tag = 'input window, operand 7, single buffered']
    #allocation8 [shape = 's32[1]{0}', space=sflag, size = 0x4, scoped, tag = 'scoped memory for policy_net_forward.1']
    %21 = vsyncpa [#allocation6], 0
    %22 = vsyncpa [#allocation8], 0
    // Predicated region
    $region2: #{policy_net_forward.1} parent=1 // pred_check
      _
    $region3: #{policy_net_forward.1} parent=1 // pred_check_branch
      %24 = sbr.rel (0) target = $region5
    $region4: #{policy_net_forward.1} parent=1 // pred_region
      _
    $region5: #{policy_net_forward.1} parent=1 // pred_fallthru
      _
    // Predicated region
    $region6: #{policy_net_forward.1} parent=1 // pred_check
      _
    $region7: #{policy_net_forward.1} parent=1 // pred_check_branch
      %26 = sbr.rel (0) target = $region9
    $region8: #{policy_net_forward.1} parent=1 // pred_region
      _
    $region9: #{policy_net_forward.1} parent=1 // pred_fallthru
      _
    // Predicated region
    $region10: #{policy_net_forward.1} parent=1 // pred_check
      _
    $region11: #{policy_net_forward.1} parent=1 // pred_check_branch
      %28 = sbr.rel (0) target = $region13
    $region12: #{policy_net_forward.1} parent=1 // pred_region
      _
    $region13: #{policy_net_forward.1} parent=1 // pred_fallthru
      _
    // Predicated region
    $region14: #{policy_net_forward.1} parent=1 // pred_check
      _
    $region15: #{policy_net_forward.1} parent=1 // pred_check_branch
      %30 = sbr.rel (0) target = $region17
    $region16: #{policy_net_forward.1} parent=1 // pred_region
      %s32 = ssub.s32 1024, 1024
      %33 = vsyncadd [#allocation6], %s32
      %s34 = sshll.u32 [#allocation5], 4
      %s35 = int_to_ptr.vmem [resolvable:$true] %s34
      %40 = dma.hbm_to_vmem [thread:$0]  %s5, 1024, %s35, [#allocation6], 64, 64, 4
    $region17: #{policy_net_forward.1} parent=1 // pred_fallthru
      _
    // Predicated region
    $region18: #{policy_net_forward.1} parent=1 // pred_check
      _
    $region19: #{policy_net_forward.1} parent=1 // pred_check_branch
      %42 = sbr.rel (0) target = $region21
    $region20: #{policy_net_forward.1} parent=1 // pred_region
      _
    $region21: #{policy_net_forward.1} parent=1 // pred_fallthru
      _
    // Predicated region
    $region22: #{policy_net_forward.1} parent=1 // pred_check
      _
    $region23: #{policy_net_forward.1} parent=1 // pred_check_branch
      %44 = sbr.rel (0) target = $region25
    $region24: #{policy_net_forward.1} parent=1 // pred_region
      %s45 = sld [smem:[#allocation3]]
      %s47 = ssub.s32 1024, 1024
      %48 = vsyncadd [#allocation8], %s47
      %s49 = smul.addr %s45, 16
      %s50 = smul.addr %s49, 64
      %s51 = scalar_lea.hbm %s7, %s50
      %s52 = sshll.u32 [#allocation7], 4
      %s53 = int_to_ptr.vmem [resolvable:$true] %s52
      %58 = dma.hbm_to_vmem [thread:$0]  %s51, 1024, %s53, [#allocation8], 64, 64, 4
    $region25: #{policy_net_forward.1} parent=1 // pred_fallthru
      _
    // Predicated region
    $region26: #{policy_net_forward.1} parent=1 // pred_check
      _
    $region27: #{policy_net_forward.1} parent=1 // pred_check_branch
      %60 = sbr.rel (0) target = $region29
    $region28: #{policy_net_forward.1} parent=1 // pred_region
      %s61 = sld [smem:[#allocation3]]
      %p62 = scmp.lt.s32.totalorder %s61, 1
      %s63 = scalar_select %p62, %s61, 1
      %s64 = scalar_lea.vmem %s8, %s63
      %s65 = sld [smem:[#allocation3]]
    $region29: #{policy_net_forward.1} parent=1 // pred_fallthru
      _
    // Predicated region
    $region30: #{policy_net_forward.1} parent=1 // pred_check
      _
    $region31: #{policy_net_forward.1} parent=1 // pred_check_branch
      %67 = sbr.rel (0) target = $region33
    $region32: #{policy_net_forward.1} parent=1 // pred_region
      %68 = dma.done [#allocation6], 1024
    $region33: #{policy_net_forward.1} parent=1 // pred_fallthru
      _
    // Predicated region
    $region34: #{policy_net_forward.1} parent=1 // pred_check
      _
    $region35: #{policy_net_forward.1} parent=1 // pred_check_branch
      %70 = sbr.rel (0) target = $region37
    $region36: #{policy_net_forward.1} parent=1 // pred_region
      %71 = dma.done [#allocation8], 1024
    $region37: #{policy_net_forward.1} parent=1 // pred_fallthru
      _
    %s72 = sld [smem:[#allocation3]]
    %p73 = scmp.lt.s32.totalorder %s72, 1
    %s74 = scalar_select %p73, %s72, 1
    %s75 = scalar_lea.vmem %s8, %s74
    %s76 = sld [smem:[#allocation3]]
    %s77 = sld [smem:[#allocation3]]
    %p78 = scmp.lt.s32.totalorder %s77, 1
    %s79 = scalar_select %p78, %s77, 1
    %s80 = scalar_lea.vmem %s8, %s79
    %s81 = sld [smem:[#allocation3]]
    %v83 = vld [vmem:[%s2] sm:$0xf]
    %v84 = vld [vmem:[%s2 + $0x4] sm:$0xf]
    %v85 = vld [vmem:[%s3] sm:$0x7]
    %v86 = vld [vmem:[%s4] sm:$0x1]
    %v88 = vlaneseq
    %v89 = vshrl.u32 %v88, 7
    %v90 = vsub.s32 0, %v89
    %v91 = vrot.slane %v86, %v90
    %v95 = vunpack.c.l.b16 %v83
    %v96 = vunpack.c.l.b16 %v84
    %v97 = vpack.c.b16 %v96, %v95
    %vm98 = vcmask 39936
    %v100 = vsel %vm98, %v97, 0
    %vm102 = vcmask 1041408
    %vm103 = vcmask 1042432
    %v104 = vsel %vm102, 4294967295, 65535
    %v105 = vsel %vm103, %v104, 0
    %v107 = vand.u32 %v85, %v105
    %109 = vmatprep.subr.bf16.mxu0 0
    %110 = vmatpush1.bf16.msra.mxu0 %v107
    %111 = vmatprep.subr.bf16.mxu0 0
    %112 = vmatpush1.bf16.msra.mxu0 0
    %113 = vmatprep.subr.bf16.mxu0 0
    %114 = vmatpush1.bf16.msra.mxu0 0
    %115 = vmatprep.subr.bf16.mxu0 0
    %116 = vmatpush1.bf16.msra.mxu0 0
    %117 = vmatprep.subr.bf16.mxu0 0
    %118 = vmatpush1.bf16.msra.mxu0 0
    %119 = vmatprep.subr.bf16.mxu0 0
    %120 = vmatpush1.bf16.msra.mxu0 0
    %121 = vmatprep.subr.bf16.mxu0 0
    %122 = vmatpush1.bf16.msra.mxu0 0
    %123 = vmatprep.subr.bf16.mxu0 0
    %124 = vmatpush1.bf16.msra.mxu0 0
    %125 = vmatprep.subr.bf16.mxu0 0
    %126 = vmatpush1.bf16.msra.mxu0 0
    %127 = vmatprep.subr.bf16.mxu0 0
    %128 = vmatpush1.bf16.msra.mxu0 0
    %129 = vmatprep.subr.bf16.mxu0 0
    %130 = vmatpush1.bf16.msra.mxu0 0
    %131 = vmatprep.subr.bf16.mxu0 0
    %132 = vmatpush1.bf16.msra.mxu0 0
    %133 = vmatprep.subr.bf16.mxu0 0
    %134 = vmatpush1.bf16.msra.mxu0 0
    %135 = vmatprep.subr.bf16.mxu0 0
    %136 = vmatpush1.bf16.msra.mxu0 0
    %137 = vmatprep.subr.bf16.mxu0 0
    %138 = vmatpush1.bf16.msra.mxu0 0
    %139 = vmatprep.subr.bf16.mxu0 0
    %140 = vmatpush1.bf16.msra.mxu0 0
    %141 = vmatprep.mubr.bf16.mxu0 0
    %142 = vmatmul.mubr.bf16.gmra.mrb[0].mxu0 %v100
    %v143 = vpop.f32.mrb[0].mxu0
    %v144 = vadd.f32 %v91, %v143
    %v145 = vpop.f32.mrb[0].mxu0
    %v146 = vpop.f32.mrb[0].mxu0
    %v147 = vadd.f32 %v91, %v146
    %v148 = vpop.f32.mrb[0].mxu0
    %149 = vdwg.mxu0
    %v150 = vmax.f32 %v144, 0.0
    %v151 = vmax.f32 %v147, 0.0
    %v152 = vpack.c.bf16 %v151, %v150
    %v153 = vld [vmem:[#allocation5] sm:$0xf]
    %v154 = vld [vmem:[#allocation5 + $0x4] sm:$0xf]
    %v155 = vld [vmem:[#allocation5 + $0x8] sm:$0xf]
    %v156 = vld [vmem:[#allocation5 + $0xc] sm:$0xf]
    %v157 = vld [vmem:[#allocation5 + $0x10] sm:$0xf]
    %v158 = vld [vmem:[#allocation5 + $0x14] sm:$0xf]
    %v159 = vld [vmem:[#allocation5 + $0x18] sm:$0xf]
    %v160 = vld [vmem:[#allocation5 + $0x1c] sm:$0xf]
    %v161 = vld [vmem:[#allocation5 + $0x20] sm:$0xf]
    %v162 = vld [vmem:[#allocation5 + $0x24] sm:$0xf]
    %v163 = vld [vmem:[#allocation5 + $0x28] sm:$0xf]
    %v164 = vld [vmem:[#allocation5 + $0x2c] sm:$0xf]
    %v165 = vld [vmem:[#allocation5 + $0x30] sm:$0xf]
    %v166 = vld [vmem:[#allocation5 + $0x34] sm:$0xf]
    %v167 = vld [vmem:[#allocation5 + $0x38] sm:$0xf]
    %v168 = vld [vmem:[#allocation5 + $0x3c] sm:$0xf]
    %v169 = vld [vmem:[%s6] sm:$0x1]
    %v171 = vlaneseq
    %v172 = vshrl.u32 %v171, 7
    %v173 = vsub.s32 0, %v172
    %v174 = vrot.slane %v169, %v173
    %v192 = vunpack.c.l.b16 %v153
    %v193 = vunpack.c.l.b16 %v154
    %v194 = vunpack.c.l.b16 %v155
    %v195 = vunpack.c.l.b16 %v156
    %v196 = vunpack.c.l.b16 %v157
    %v197 = vunpack.c.l.b16 %v158
    %v198 = vunpack.c.l.b16 %v159
    %v199 = vunpack.c.l.b16 %v160
    %v200 = vunpack.c.l.b16 %v161
    %v201 = vunpack.c.l.b16 %v162
    %v202 = vunpack.c.l.b16 %v163
    %v203 = vunpack.c.l.b16 %v164
    %v204 = vunpack.c.l.b16 %v165
    %v205 = vunpack.c.l.b16 %v166
    %v206 = vunpack.c.l.b16 %v167
    %v207 = vunpack.c.l.b16 %v168
    %v208 = vpack.c.b16 %v193, %v192
    %v209 = vpack.c.b16 %v195, %v194
    %v210 = vpack.c.b16 %v197, %v196
    %v211 = vpack.c.b16 %v199, %v198
    %v212 = vpack.c.b16 %v201, %v200
    %v213 = vpack.c.b16 %v203, %v202
    %v214 = vpack.c.b16 %v205, %v204
    %v215 = vpack.c.b16 %v207, %v206
    %224 = vmatprep.subr.bf16.mxu0 0
    %225 = vmatpush1.bf16.msra.mxu0 %v208
    %226 = vmatprep.subr.bf16.mxu0 0
    %227 = vmatpush1.bf16.msra.mxu0 %v209
    %228 = vmatprep.subr.bf16.mxu0 0
    %229 = vmatpush1.bf16.msra.mxu0 %v210
    %230 = vmatprep.subr.bf16.mxu0 0
    %231 = vmatpush1.bf16.msra.mxu0 %v211
    %232 = vmatprep.subr.bf16.mxu0 0
    %233 = vmatpush1.bf16.msra.mxu0 %v212
    %234 = vmatprep.subr.bf16.mxu0 0
    %235 = vmatpush1.bf16.msra.mxu0 %v213
    %236 = vmatprep.subr.bf16.mxu0 0
    %237 = vmatpush1.bf16.msra.mxu0 %v214
    %238 = vmatprep.subr.bf16.mxu0 0
    %239 = vmatpush1.bf16.msra.mxu0 %v215
    %240 = vmatprep.subr.bf16.mxu0 0
    %241 = vmatpush1.bf16.msra.mxu0 0
    %242 = vmatprep.subr.bf16.mxu0 0
    %243 = vmatpush1.bf16.msra.mxu0 0
    %244 = vmatprep.subr.bf16.mxu0 0
    %245 = vmatpush1.bf16.msra.mxu0 0
    %246 = vmatprep.subr.bf16.mxu0 0
    %247 = vmatpush1.bf16.msra.mxu0 0
    %248 = vmatprep.subr.bf16.mxu0 0
    %249 = vmatpush1.bf16.msra.mxu0 0
    %250 = vmatprep.subr.bf16.mxu0 0
    %251 = vmatpush1.bf16.msra.mxu0 0
    %252 = vmatprep.subr.bf16.mxu0 0
    %253 = vmatpush1.bf16.msra.mxu0 0
    %254 = vmatprep.subr.bf16.mxu0 0
    %255 = vmatpush1.bf16.msra.mxu0 0
    %256 = vmatprep.mubr.bf16.mxu0 0
    %257 = vmatmul.mubr.bf16.gmra.mrb[0].mxu0 %v152
    %v258 = vpop.f32.mrb[0].mxu0
    %v259 = vadd.f32 %v174, %v258
    %v260 = vpop.f32.mrb[0].mxu0
    %v261 = vpop.f32.mrb[0].mxu0
    %v262 = vadd.f32 %v174, %v261
    %v263 = vpop.f32.mrb[0].mxu0
    %264 = vdwg.mxu0
    %v265 = vmax.f32 %v259, 0.0
    %v266 = vmax.f32 %v262, 0.0
    %v267 = vpack.c.bf16 %v266, %v265
    %v268 = vld [vmem:[#allocation7] sm:$0xf]
    %v269 = vld [vmem:[#allocation7 + $0x4] sm:$0xf]
    %v270 = vld [vmem:[#allocation7 + $0x8] sm:$0xf]
    %v271 = vld [vmem:[#allocation7 + $0xc] sm:$0xf]
    %v272 = vld [vmem:[#allocation7 + $0x10] sm:$0xf]
    %v273 = vld [vmem:[#allocation7 + $0x14] sm:$0xf]
    %v274 = vld [vmem:[#allocation7 + $0x18] sm:$0xf]
    %v275 = vld [vmem:[#allocation7 + $0x1c] sm:$0xf]
    %v276 = vld [vmem:[#allocation7 + $0x20] sm:$0xf]
    %v277 = vld [vmem:[#allocation7 + $0x24] sm:$0xf]
    %v278 = vld [vmem:[#allocation7 + $0x28] sm:$0xf]
    %v279 = vld [vmem:[#allocation7 + $0x2c] sm:$0xf]
    %v280 = vld [vmem:[#allocation7 + $0x30] sm:$0xf]
    %v281 = vld [vmem:[#allocation7 + $0x34] sm:$0xf]
    %v282 = vld [vmem:[#allocation7 + $0x38] sm:$0xf]
    %v283 = vld [vmem:[#allocation7 + $0x3c] sm:$0xf]
    %v284 = vld [vmem:[%s80] sm:$0x1]
    %v286 = vlaneseq
    %v287 = vshrl.u32 %v286, 7
    %v288 = vsub.s32 0, %v287
    %v289 = vrot.slane %v284, %v288
    %v307 = vunpack.c.l.b16 %v268
    %v308 = vunpack.c.l.b16 %v269
    %v309 = vunpack.c.l.b16 %v270
    %v310 = vunpack.c.l.b16 %v271
    %v311 = vunpack.c.l.b16 %v272
    %v312 = vunpack.c.l.b16 %v273
    %v313 = vunpack.c.l.b16 %v274
    %v314 = vunpack.c.l.b16 %v275
    %v315 = vunpack.c.l.b16 %v276
    %v316 = vunpack.c.l.b16 %v277
    %v317 = vunpack.c.l.b16 %v278
    %v318 = vunpack.c.l.b16 %v279
    %v319 = vunpack.c.l.b16 %v280
    %v320 = vunpack.c.l.b16 %v281
    %v321 = vunpack.c.l.b16 %v282
    %v322 = vunpack.c.l.b16 %v283
    %v323 = vpack.c.b16 %v308, %v307
    %v324 = vpack.c.b16 %v310, %v309
    %v325 = vpack.c.b16 %v312, %v311
    %v326 = vpack.c.b16 %v314, %v313
    %v327 = vpack.c.b16 %v316, %v315
    %v328 = vpack.c.b16 %v318, %v317
    %v329 = vpack.c.b16 %v320, %v319
    %v330 = vpack.c.b16 %v322, %v321
    %339 = vmatprep.subr.bf16.mxu0 0
    %340 = vmatpush1.bf16.msra.mxu0 %v323
    %341 = vmatprep.subr.bf16.mxu0 0
    %342 = vmatpush1.bf16.msra.mxu0 %v324
    %343 = vmatprep.subr.bf16.mxu0 0
    %344 = vmatpush1.bf16.msra.mxu0 %v325
    %345 = vmatprep.subr.bf16.mxu0 0
    %346 = vmatpush1.bf16.msra.mxu0 %v326
    %347 = vmatprep.subr.bf16.mxu0 0
    %348 = vmatpush1.bf16.msra.mxu0 %v327
    %349 = vmatprep.subr.bf16.mxu0 0
    %350 = vmatpush1.bf16.msra.mxu0 %v328
    %351 = vmatprep.subr.bf16.mxu0 0
    %352 = vmatpush1.bf16.msra.mxu0 %v329
    %353 = vmatprep.subr.bf16.mxu0 0
    %354 = vmatpush1.bf16.msra.mxu0 %v330
    %355 = vmatprep.subr.bf16.mxu0 0
    %356 = vmatpush1.bf16.msra.mxu0 0
    %357 = vmatprep.subr.bf16.mxu0 0
    %358 = vmatpush1.bf16.msra.mxu0 0
    %359 = vmatprep.subr.bf16.mxu0 0
    %360 = vmatpush1.bf16.msra.mxu0 0
    %361 = vmatprep.subr.bf16.mxu0 0
    %362 = vmatpush1.bf16.msra.mxu0 0
    %363 = vmatprep.subr.bf16.mxu0 0
    %364 = vmatpush1.bf16.msra.mxu0 0
    %365 = vmatprep.subr.bf16.mxu0 0
    %366 = vmatpush1.bf16.msra.mxu0 0
    %367 = vmatprep.subr.bf16.mxu0 0
    %368 = vmatpush1.bf16.msra.mxu0 0
    %369 = vmatprep.subr.bf16.mxu0 0
    %370 = vmatpush1.bf16.msra.mxu0 0
    %371 = vmatprep.mubr.bf16.mxu0 0
    %372 = vmatmul.mubr.bf16.gmra.mrb[0].mxu0 %v267
    %v373 = vpop.f32.mrb[0].mxu0
    %v374 = vadd.f32 %v289, %v373
    %v375 = vpop.f32.mrb[0].mxu0
    %v376 = vpop.f32.mrb[0].mxu0
    %v377 = vadd.f32 %v289, %v376
    %v378 = vpop.f32.mrb[0].mxu0
    %379 = vdwg.mxu0
    %s380 = sld [smem:[#allocation3]]
    %s381 = sld [smem:[#allocation4 + %s380]]
    %v382 = vlaneseq
    %v383 = vand.u32 %v382, 127
    %v384 = vstv %s381
    %vm385 = vcmp.lt.s32.totalorder %v383, %v384
    %v386 = vsel %vm385, 1, 0
    %vm387 = vcmp.eq.s32.totalorder %v386, 1
    %v388 = vsel %vm387, %v374, -3.4028235e+38
    %v389 = vsel %vm387, %v377, -3.4028235e+38
    %390 = vmax.xlane.f32.xlu0 %v388
    %v391 = vpop.xlane.xlu0 %390
    %392 = vmax.xlane.f32.xlu0 %v389
    %v393 = vpop.xlane.xlu0 %392
    %v394 = vsub.f32 %v388, %v391
    %v395 = vsub.f32 %v389, %v393
    %v396 = vmul.f32 %v394, 1.442695
    %v397 = vpow.pop %v396
    %v398 = vmul.f32 %v395, 1.442695
    %v399 = vpow.pop %v398
    %400 = vadd.xlane.f32.xlu0 %v397
    %v401 = vpop.xlane.xlu0 %400
    %402 = vadd.xlane.f32.xlu0 %v399
    %v403 = vpop.xlane.xlu0 %402
    %v404 = vrcp.pop %v401
    %v405 = vrcp.pop %v403
    %v406 = vmul.f32 %v397, %v404
    %v407 = vmul.f32 %v399, %v405
    %v408 = vpack.c.bf16 %v407, %v406
    %v410 = vunpack.c.l.b16 %v408
    %v411 = vunpack.c.h.b16 %v408
    %v412 = vpack.c.b16 %v410, %v410
    %v413 = vpack.c.b16 %v411, %v411
    %416 = vst [vmem:[%s9] sm:$0xf] %v412
    %417 = vst [vmem:[%s9 + $0x4] sm:$0xf] %v413
    // Predicated region
    $region38: #{policy_net_forward.1} parent=1 // pred_check
      _
    $region39: #{policy_net_forward.1} parent=1 // pred_check_branch
      %419 = sbr.rel (0) target = $region41
    $region40: #{policy_net_forward.1} parent=1 // pred_region
      _
    $region41: #{policy_net_forward.1} parent=1 // pred_fallthru
      _
    // Predicated region
    $region42: #{policy_net_forward.1} parent=1 // pred_check
      _
    $region43: #{policy_net_forward.1} parent=1 // pred_check_branch
      %421 = sbr.rel (0) target = $region45
    $region44: #{policy_net_forward.1} parent=1 // pred_region
      _
    $region45: #{policy_net_forward.1} parent=1 // pred_fallthru
      _
    %422 = vsyncpa [#allocation6], 1
    %423 = vsyncpa [#allocation8], 1

</llo_original>
